<compile_context>
chip_gen: v5e
topology: v5e:2x2
jax: 0.10.0
libtpu: 0.0.40
codegen_flags: <defaults>
</compile_context>

<pallas_src>
import math

import jax
import jax.numpy as jnp
from jax.experimental import pallas as pl
from jax.experimental.pallas import tpu as pltpu

LANE = 128
SUB = 16            # sublane multiple (also covers bf16 (16,128) packing)
MAX_TILE_R = 1024   # 1024 x 128 f32 = 512 KiB per input tile (double-buffered)


def _round_up(x, m):
    return (x + m - 1) // m * m


def _loss_expr(c, io, eps):
    c = c.astype(jnp.float32)
    io = io.astype(jnp.float32)
    a = c + eps
    b = io + eps
    # a/b + b/a == (a*a + b*b) / (a*b): one reciprocal instead of two divides.
    ratio = (a * a + b * b) * pl.reciprocal(a * b, approx=False)
    return (1.0 - c * io) * (ratio - 1.7)


def _make_map_kernel(eps, weighted):
    if weighted:
        def kernel(c_ref, i_ref, w_ref, o_ref):
            loss = _loss_expr(c_ref[...], i_ref[...], eps)
            o_ref[...] = loss * w_ref[...].astype(jnp.float32)
    else:
        def kernel(c_ref, i_ref, o_ref):
            o_ref[...] = _loss_expr(c_ref[...], i_ref[...], eps)
    return kernel


def _make_sum_kernel(eps, weighted):
    # Each grid step writes its own per-tile partial (column sums over the
    # sublane axis) -> no carried state -> grid axis can be "parallel".
    if weighted:
        def kernel(c_ref, i_ref, w_ref, part_ref):
            loss = _loss_expr(c_ref[...], i_ref[...], eps)
            loss = loss * w_ref[...].astype(jnp.float32)
            part_ref[0] = jnp.sum(loss, axis=0, keepdims=True)
    else:
        def kernel(c_ref, i_ref, part_ref):
            loss = _loss_expr(c_ref[...], i_ref[...], eps)
            part_ref[0] = jnp.sum(loss, axis=0, keepdims=True)
    return kernel


def _pallas_loss_map(c2d, i2d, w2d, eps, tile_r):
    R = c2d.shape[0]
    grid_n = R // tile_r
    weighted = w2d is not None
    tile_spec = pl.BlockSpec((tile_r, LANE), lambda i: (i, 0))
    in_specs = [tile_spec, tile_spec] + ([tile_spec] if weighted else [])
    args = (c2d, i2d) + ((w2d,) if weighted else ())
    return pl.pallas_call(
        _make_map_kernel(float(eps), weighted),
        out_shape=jax.ShapeDtypeStruct((R, LANE), jnp.float32),
        grid_spec=pltpu.PrefetchScalarGridSpec(
            num_scalar_prefetch=0,
            grid=(grid_n,),
            in_specs=in_specs,
            out_specs=pl.BlockSpec((tile_r, LANE), lambda i: (i, 0)),
        ),
        compiler_params=pltpu.CompilerParams(
            dimension_semantics=("parallel",)),
    )(*args)


def _pallas_loss_sum(c2d, i2d, w2d, eps, tile_r):
    R = c2d.shape[0]
    grid_n = R // tile_r
    weighted = w2d is not None
    tile_spec = pl.BlockSpec((tile_r, LANE), lambda i: (i, 0))
    in_specs = [tile_spec, tile_spec] + ([tile_spec] if weighted else [])
    args = (c2d, i2d) + ((w2d,) if weighted else ())
    partials = pl.pallas_call(
        _make_sum_kernel(float(eps), weighted),
        out_shape=jax.ShapeDtypeStruct((grid_n, 1, LANE), jnp.float32),
        grid_spec=pltpu.PrefetchScalarGridSpec(
            num_scalar_prefetch=0,
            grid=(grid_n,),
            in_specs=in_specs,
            out_specs=pl.BlockSpec((1, 1, LANE), lambda i: (i, 0, 0)),
        ),
        compiler_params=pltpu.CompilerParams(
            dimension_semantics=("parallel",)),
    )(*args)
    # Tiny finishing reduction over (grid_n * 128) floats.
    return jnp.sum(partials)


def _prep(x, pad, R, pad_value):
    x = jnp.asarray(x)
    if x.dtype != jnp.float32 and x.dtype != jnp.bfloat16:
        x = x.astype(jnp.float32)
    flat = jnp.ravel(x)
    if pad:
        flat = jnp.pad(flat, (0, pad), constant_values=pad_value)
    return flat.reshape(R, LANE)


class ConsistencyLoss:
    """JAX/Pallas port of mmdet ConsistencyLoss (forward only)."""

    def __init__(self, reduction="mean", loss_weight=1.0, eps=0.6):
        self.reduction = reduction
        self.loss_weight = loss_weight
        self.eps = eps

    def __call__(self, cls_scores, ious, weight=None,
                 reduction_override=None, avg_factor=None):
        assert reduction_override in (None, "none", "mean", "sum")
        reduction = reduction_override if reduction_override else self.reduction
        if avg_factor is not None and reduction == "sum":
            # Matches mmcv weight_reduce_loss behavior.
            raise ValueError('avg_factor can not be used with reduction="sum"')

        orig_shape = cls_scores.shape
        n_elem = max(1, math.prod(orig_shape))

        # Pick a row tile that minimizes padding while staying <= MAX_TILE_R.
        r_raw = -(-n_elem // LANE)
        num_tiles = -(-r_raw // MAX_TILE_R)
        tile_r = _round_up(-(-r_raw // num_tiles), SUB)
        R = tile_r * num_tiles
        pad = R * LANE - n_elem

        # Padding both cls and iou with 1.0 makes the padded loss exactly 0
        # for any eps != -1 (since 1 - 1*1 == 0), so no tail mask is needed.
        c2d = _prep(cls_scores, pad, R, 1.0)
        i2d = _prep(ious, pad, R, 1.0)

        w2d = None
        if weight is not None:
            w = jnp.broadcast_to(jnp.asarray(weight), orig_shape)
            w2d = _prep(w, pad, R, 0.0)

        if reduction == "none":
            loss_map = _pallas_loss_map(c2d, i2d, w2d, self.eps, tile_r)
            if pad:
                loss = loss_map.reshape(-1)[:n_elem].reshape(orig_shape)
            else:
                loss = loss_map.reshape(orig_shape)
            return self.loss_weight * loss

        total = _pallas_loss_sum(c2d, i2d, w2d, self.eps, tile_r)
        if reduction == "mean":
            denom = avg_factor if avg_factor is not None else n_elem
            total = total / denom
        return self.loss_weight * total


def _reference(cls_scores, ious, weight, eps, reduction, avg_factor, loss_weight):
    loss = (1 - cls_scores * ious) * (
        (cls_scores + eps) / (ious + eps)
        + (ious + eps) / (cls_scores + eps)
        - 1.7
    )
    if weight is not None:
        loss = loss * weight
    if reduction == "mean":
        loss = jnp.sum(loss) / (avg_factor if avg_factor is not None else loss.size)
    elif reduction == "sum":
        loss = jnp.sum(loss)
    return loss_weight * loss


if __name__ == "__main__":
    key = jax.random.PRNGKey(0)
    k1, k2, k3, k4, k5 = jax.random.split(key, 5)
    shape = (2, 4, 16, 16)  # (n, *) prediction / iou maps
    cls_scores = jax.random.uniform(k1, shape, jnp.float32)
    ious = jax.random.uniform(k2, shape, jnp.float32)
    weight = jax.random.uniform(k3, shape, jnp.float32)

    loss_mod = ConsistencyLoss(reduction="mean", loss_weight=1.0, eps=0.6)

    out_mean = jax.block_until_ready(loss_mod(cls_scores, ious))
    out_sum = jax.block_until_ready(
        loss_mod(cls_scores, ious, reduction_override="sum"))
    out_none = jax.block_until_ready(
        loss_mod(cls_scores, ious, reduction_override="none"))
    out_wmean = jax.block_until_ready(loss_mod(cls_scores, ious, weight=weight))
    out_avgf = jax.block_until_ready(loss_mod(cls_scores, ious, avg_factor=100.0))

    ref_mean = _reference(cls_scores, ious, None, 0.6, "mean", None, 1.0)
    ref_sum = _reference(cls_scores, ious, None, 0.6, "sum", None, 1.0)
    ref_none = _reference(cls_scores, ious, None, 0.6, "none", None, 1.0)
    ref_wmean = _reference(cls_scores, ious, weight, 0.6, "mean", None, 1.0)
    ref_avgf = _reference(cls_scores, ious, None, 0.6, "mean", 100.0, 1.0)

    assert jnp.allclose(out_mean, ref_mean, rtol=1e-5, atol=1e-5)
    assert jnp.allclose(out_sum, ref_sum, rtol=1e-5, atol=1e-4)
    assert jnp.allclose(out_none, ref_none, rtol=1e-5, atol=1e-5)
    assert jnp.allclose(out_wmean, ref_wmean, rtol=1e-5, atol=1e-5)
    assert jnp.allclose(out_avgf, ref_avgf, rtol=1e-5, atol=1e-5)
    assert out_none.shape == shape

    # Ragged shape exercising the in-wrapper padding / tail handling.
    rshape = (3, 5, 7)
    rc = jax.random.uniform(k4, rshape, jnp.float32)
    ri = jax.random.uniform(k5, rshape, jnp.float32)
    out_rsum = jax.block_until_ready(loss_mod(rc, ri, reduction_override="sum"))
    out_rnone = jax.block_until_ready(loss_mod(rc, ri, reduction_override="none"))
    ref_rsum = _reference(rc, ri, None, 0.6, "sum", None, 1.0)
    ref_rnone = _reference(rc, ri, None, 0.6, "none", None, 1.0)
    assert jnp.allclose(out_rsum, ref_rsum, rtol=1e-5, atol=1e-4)
    assert jnp.allclose(out_rnone, ref_rnone, rtol=1e-5, atol=1e-5)
    assert out_rnone.shape == rshape

    print("KERNEL_OK")
</pallas_src>

<mosaic_0001>
module attributes {stable_mosaic.version = 11 : i64} {
  func.func @kernel(%arg0: i32, %arg1: memref<16x128xf32, #tpu.memory_space<vmem>>, %arg2: memref<16x128xf32, #tpu.memory_space<vmem>>, %arg3: memref<1x1x128xf32, #tpu.memory_space<vmem>>) attributes {dimension_semantics = [#tpu.dimension_semantics<parallel>], iteration_bounds = array<i64: 1>, scalar_prefetch = 0 : i64, scratch_operands = 0 : i64, tpu.core_type = #tpu.core_type<tc>, window_params = [{transform_indices = @transform_0, window_bounds = array<i64: 16, 128>}, {transform_indices = @transform_1, window_bounds = array<i64: 16, 128>}, {transform_indices = @transform_2, window_bounds = array<i64: 1, 1, 128>}]} {
    %c0 = arith.constant 0 : index
    %c0_0 = arith.constant 0 : index
    %0 = vector.load %arg1[%c0, %c0_0] : memref<16x128xf32, #tpu.memory_space<vmem>>, vector<16x128xf32>
    %c0_1 = arith.constant 0 : index
    %c0_2 = arith.constant 0 : index
    %1 = vector.load %arg2[%c0_1, %c0_2] : memref<16x128xf32, #tpu.memory_space<vmem>>, vector<16x128xf32>
    %cst = arith.constant 6.000000e-01 : f32
    %2 = vector.broadcast %cst : f32 to vector<16x128xf32>
    %3 = arith.addf %0, %2 : vector<16x128xf32>
    %cst_3 = arith.constant 6.000000e-01 : f32
    %4 = vector.broadcast %cst_3 : f32 to vector<16x128xf32>
    %5 = arith.addf %1, %4 : vector<16x128xf32>
    %6 = arith.mulf %3, %3 : vector<16x128xf32>
    %7 = arith.mulf %5, %5 : vector<16x128xf32>
    %8 = arith.addf %6, %7 : vector<16x128xf32>
    %9 = arith.mulf %3, %5 : vector<16x128xf32>
    %10 = tpu.reciprocal %9 : vector<16x128xf32> -> vector<16x128xf32>
    %11 = arith.mulf %8, %10 : vector<16x128xf32>
    %12 = arith.mulf %0, %1 : vector<16x128xf32>
    %cst_4 = arith.constant 1.000000e+00 : f32
    %13 = vector.broadcast %cst_4 : f32 to vector<16x128xf32>
    %14 = arith.subf %13, %12 : vector<16x128xf32>
    %cst_5 = arith.constant 1.700000e+00 : f32
    %15 = vector.broadcast %cst_5 : f32 to vector<16x128xf32>
    %16 = arith.subf %11, %15 : vector<16x128xf32>
    %17 = arith.mulf %14, %16 : vector<16x128xf32>
    %cst_6 = arith.constant dense<0.000000e+00> : vector<128xf32>
    %18 = vector.multi_reduction <add>, %17, %cst_6 [0] : vector<16x128xf32> to vector<128xf32>
    %19 = vector.shape_cast %18 : vector<128xf32> to vector<1x128xf32>
    %c0_7 = arith.constant 0 : index
    %c0_8 = arith.constant 0 : index
    %c0_9 = arith.constant 0 : index
    %20 = vector.load %arg3[%c0_7, %c0_8, %c0_9] : memref<1x1x128xf32, #tpu.memory_space<vmem>>, vector<1x1x128xf32>
    %21 = vector.shape_cast %20 : vector<1x1x128xf32> to vector<1x128xf32>
    %22 = vector.shape_cast %19 : vector<1x128xf32> to vector<1x1x128xf32>
    tpu.vector_store %arg3[%c0_7, %c0_8, %c0_9], %22 {strides = array<i32>} : memref<1x1x128xf32, #tpu.memory_space<vmem>>, vector<1x1x128xf32>,
    return
  }
  func.func @transform_0(%arg0: i32) -> (i32, i32) {
    %c0_i32 = arith.constant 0 : i32
    %c0_i32_0 = arith.constant 0 : i32
    return %arg0, %c0_i32 : i32, i32
  }
  func.func @transform_1(%arg0: i32) -> (i32, i32) {
    %c0_i32 = arith.constant 0 : i32
    %c0_i32_0 = arith.constant 0 : i32
    return %arg0, %c0_i32 : i32, i32
  }
  func.func @transform_2(%arg0: i32) -> (i32, i32, i32) {
    %c0_i32 = arith.constant 0 : i32
    %c0_i32_0 = arith.constant 0 : i32
    %c0_i32_1 = arith.constant 0 : i32
    return %arg0, %c0_i32, %c0_i32_0 : i32, i32, i32
  }
}

</mosaic_0001>

<llo_original>
// kernel: tpu_custom_call.1
$region0: #{tpu_custom_call.1}
  #allocation0 [shape = 'u32[]', space=smem, size = 0x4, offset = 0x4, fixed_abs, tag = 'smem constant byte address 0x4 - core index']
  #allocation1 [shape = 'u32[72,128]{1,0:T(1,128)}', space=vmem, size = 0x9000, scoped, tag = 'internal scratch']
  %s0 = inlined_call_operand.hbm [shape: f32[16,128], index: 0, kind: input, shape index: {}]
  %s1 = inlined_call_operand.hbm [shape: f32[16,128], index: 1, kind: input, shape index: {}]
  %s2 = inlined_call_operand.hbm [shape: f32[1,1,128], index: 2, kind: output, shape index: {}]
  %s3 = sld [smem:[#allocation0]]
  $region26: #{tpu_custom_call.1} parent=0
    _
  %s5 = ssub.s32 1, %s3
  %s6 = scalar_select 0, %s5, %s3
  $region1: #{tpu_custom_call.1} parent=0
    #allocation2 [shape = 'u8[8192]{0}', space=vmem, size = 0x2000, scoped, tag = 'input window, operand 0, single buffered']
    #allocation3 [shape = 's32[1]{0}', space=sflag, size = 0x4, scoped, tag = 'scoped memory for tpu_custom_call.1']
    #allocation4 [shape = 's32[1]{0}', space=sflag, size = 0x4, scoped, tag = 'scoped memory for tpu_custom_call.1']
    #allocation5 [shape = 'u8[8192]{0}', space=vmem, size = 0x2000, scoped, tag = 'input window, operand 1, single buffered']
    #allocation6 [shape = 's32[1]{0}', space=sflag, size = 0x4, scoped, tag = 'scoped memory for tpu_custom_call.1']
    #allocation7 [shape = 'u8[512]{0}', space=vmem, size = 0x400, scoped, tag = 'output window, operand 0, single buffered']
    %7 = vsyncpa [#allocation3], 0
    %8 = vsyncpa [#allocation6], 0
    %9 = vsyncpa [#allocation4], 0
    // Predicated region
    $region2: #{tpu_custom_call.1} parent=1 // pred_check
      _
    $region3: #{tpu_custom_call.1} parent=1 // pred_check_branch
      %11 = sbr.rel (0) target = $region5
    $region4: #{tpu_custom_call.1} parent=1 // pred_region
      %13 = vsyncadd [#allocation3], 0
      %s14 = sshll.u32 %s0, 4
      %s15 = int_to_ptr.hbm [resolvable:$true] %s14
      %s16 = sshll.u32 [#allocation2], 4
      %s17 = int_to_ptr.vmem [resolvable:$true] %s16
      %22 = dma.hbm_to_vmem [thread:$0]  %s15, 256, %s17, [#allocation3], 128, 128, 8
    $region5: #{tpu_custom_call.1} parent=1 // pred_fallthru
      _
    // Predicated region
    $region6: #{tpu_custom_call.1} parent=1 // pred_check
      _
    $region7: #{tpu_custom_call.1} parent=1 // pred_check_branch
      %24 = sbr.rel (0) target = $region9
    $region8: #{tpu_custom_call.1} parent=1 // pred_region
      %26 = vsyncadd [#allocation6], 0
      %s27 = sshll.u32 %s1, 4
      %s28 = int_to_ptr.hbm [resolvable:$true] %s27
      %s29 = sshll.u32 [#allocation5], 4
      %s30 = int_to_ptr.vmem [resolvable:$true] %s29
      %35 = dma.hbm_to_vmem [thread:$0]  %s28, 256, %s30, [#allocation6], 128, 128, 8
    $region9: #{tpu_custom_call.1} parent=1 // pred_fallthru
      _
    // Predicated region
    $region10: #{tpu_custom_call.1} parent=1 // pred_check
      _
    $region11: #{tpu_custom_call.1} parent=1 // pred_check_branch
      %37 = sbr.rel (0) target = $region13
    $region12: #{tpu_custom_call.1} parent=1 // pred_region
      %39 = dma.done [#allocation3], 256
    $region13: #{tpu_custom_call.1} parent=1 // pred_fallthru
      _
    // Predicated region
    $region14: #{tpu_custom_call.1} parent=1 // pred_check
      _
    $region15: #{tpu_custom_call.1} parent=1 // pred_check_branch
      %41 = sbr.rel (0) target = $region17
    $region16: #{tpu_custom_call.1} parent=1 // pred_region
      %43 = dma.done [#allocation6], 256
    $region17: #{tpu_custom_call.1} parent=1 // pred_fallthru
      _
    %v44 = vld [vmem:[#allocation2] sm:$0xff]
    %v45 = vld [vmem:[#allocation2 + $0x8] sm:$0xff]
    %v46 = vld [vmem:[#allocation5] sm:$0xff]
    %v47 = vld [vmem:[#allocation5 + $0x8] sm:$0xff]
    %v48 = vadd.f32 %v44, 0.6
    %v49 = vadd.f32 %v45, 0.6
    %v50 = vadd.f32 %v46, 0.6
    %v51 = vadd.f32 %v47, 0.6
    %v52 = vmul.f32 %v48, %v48
    %v53 = vmul.f32 %v49, %v49
    %v54 = vmul.f32 %v50, %v50
    %v55 = vmul.f32 %v51, %v51
    %v56 = vadd.f32 %v52, %v54
    %v57 = vadd.f32 %v53, %v55
    %v58 = vmul.f32 %v48, %v50
    %v59 = vmul.f32 %v49, %v51
    %v60 = vrcp.pop %v58
    %v61 = vmul.f32 %v58, %v60
    %v62 = vsub.f32 1.0, %v61
    %v63 = vmul.f32 %v60, %v62
    %v64 = vadd.f32 %v60, %v63
    %vm65 = vweird.f32 %v58
    %vm66 = vweird.f32 %v60
    %vm67 = vmor %vm65, %vm66
    %v68 = vsel %vm67, %v60, %v64
    %v69 = vand.u32 2147483647, %v58
    %vm70 = vcmp.eq.f32.partialorder %v69, 8.507059e+37
    %v71 = vand.u32 %v58, 2147483648
    %v72 = vor.u32 1.1754944e-38, %v71
    %v73 = vsel %vm70, %v72, %v68
    %v74 = vrcp.pop %v59
    %v75 = vmul.f32 %v59, %v74
    %v76 = vsub.f32 1.0, %v75
    %v77 = vmul.f32 %v74, %v76
    %v78 = vadd.f32 %v74, %v77
    %vm79 = vweird.f32 %v59
    %vm80 = vweird.f32 %v74
    %vm81 = vmor %vm79, %vm80
    %v82 = vsel %vm81, %v74, %v78
    %v83 = vand.u32 2147483647, %v59
    %vm84 = vcmp.eq.f32.partialorder %v83, 8.507059e+37
    %v85 = vand.u32 %v59, 2147483648
    %v86 = vor.u32 1.1754944e-38, %v85
    %v87 = vsel %vm84, %v86, %v82
    %v88 = vmul.f32 %v56, %v73
    %v89 = vmul.f32 %v57, %v87
    %v90 = vmul.f32 %v44, %v46
    %v91 = vmul.f32 %v45, %v47
    %v92 = vsub.f32 1.0, %v90
    %v93 = vsub.f32 1.0, %v91
    %v94 = vsub.f32 %v88, 1.7
    %v95 = vsub.f32 %v89, 1.7
    %v96 = vmul.f32 %v92, %v94
    %v97 = vmul.f32 %v93, %v95
    %v98 = vadd.f32 %v96, %v97
    %v99 = vrot.slane %v98, 4
    %v100 = vadd.f32 %v98, %v99
    %v101 = vrot.slane %v100, 2
    %v102 = vadd.f32 %v100, %v101
    %v103 = vrot.slane %v102, 1
    %v104 = vadd.f32 %v102, %v103
    %105 = vst [vmem:[#allocation7] sm:$0x1] %v104
    // Predicated region
    $region18: #{tpu_custom_call.1} parent=1 // pred_check
      _
    $region19: #{tpu_custom_call.1} parent=1 // pred_check_branch
      %107 = sbr.rel (0) target = $region21
    $region20: #{tpu_custom_call.1} parent=1 // pred_region
      %109 = vsyncadd [#allocation4], 0
      %s111 = sshll.u32 [#allocation7], 4
      %s112 = int_to_ptr.vmem [resolvable:$true] %s111
      %s113 = sshll.u32 %s2, 4
      %s114 = int_to_ptr.hbm [resolvable:$true] %s113
      %116 = dma.vmem_to_hbm [thread:$0]  %s112, 16, %s114, [#allocation4]
    $region21: #{tpu_custom_call.1} parent=1 // pred_fallthru
      _
    // Predicated region
    $region22: #{tpu_custom_call.1} parent=1 // pred_check
      _
    $region23: #{tpu_custom_call.1} parent=1 // pred_check_branch
      %118 = sbr.rel (0) target = $region25
    $region24: #{tpu_custom_call.1} parent=1 // pred_region
      %120 = dma.done [#allocation4], 16
    $region25: #{tpu_custom_call.1} parent=1 // pred_fallthru
      _
    %121 = vsyncpa [#allocation3], 1
    %122 = vsyncpa [#allocation6], 1
    %123 = vsyncpa [#allocation4], 1

</llo_original>
